<compile_context>
chip_gen: v7x
topology: tpu7x:2x2x1
jax: 0.10.0
libtpu: 0.0.40
codegen_flags: <defaults>
</compile_context>

<pallas_src>
import functools

import jax
import jax.numpy as jnp
from jax.experimental import pallas as pl
from jax.experimental.pallas import tpu as pltpu


def _round_up(x: int, m: int) -> int:
    return ((x + m - 1) // m) * m


def _mlp_kernel(x_ref, *refs, relus):
    """refs = (w_0, b_0, w_1, b_1, ..., o_ref); runs the stage chain on one tile."""
    o_ref = refs[-1]
    wb = refs[:-1]
    h = x_ref[...]
    for i, do_relu in enumerate(relus):
        w = wb[2 * i][...]
        b = wb[2 * i + 1][...]
        h = jnp.dot(h, w, preferred_element_type=jnp.float32) + b
        if do_relu:
            h = jnp.maximum(h, 0.0)
    o_ref[...] = h.astype(o_ref.dtype)


def final_head_pallas(x, params, *, relu: bool = False, block_b: int = 512):
    """FinalHead forward pass as one batch-tiled Pallas kernel.

    x:      [B, input_dim] float32
    params: dict with w1..w4 ([in, out]) and b1..b4 ([1, out])
    """
    B, d_in = x.shape
    out_dim = params["w4"].shape[1]

    # ---- wrapper-side algebraic folding (same affine map, fewer MXU passes) ----
    w23 = params["w2"] @ params["w3"]                     # [256, 64]
    b23 = params["b2"] @ params["w3"] + params["b3"]      # [1, 64]
    if relu:
        # Linear -> ReLU -> (Linear∘Linear) -> ReLU -> Linear
        stages = [(params["w1"], params["b1"], True),
                  (w23, b23, True),
                  (params["w4"], params["b4"], False)]
    else:
        # No nonlinearity anywhere: the whole MLP is a single affine map.
        w_all = params["w1"] @ w23 @ params["w4"]                          # [d_in, out]
        b_all = (params["b1"] @ w23 + b23) @ params["w4"] + params["b4"]   # [1, out]
        stages = [(w_all, b_all, False)]

    # ---- lane-dense output: pad final N up to a multiple of 128 lanes ----
    padded_out = _round_up(out_dim, 128)
    if padded_out != out_dim:
        w_last, b_last, r_last = stages[-1]
        pad = padded_out - out_dim
        stages[-1] = (jnp.pad(w_last, ((0, 0), (0, pad))),
                      jnp.pad(b_last, ((0, 0), (0, pad))),
                      r_last)

    relus = tuple(r for (_, _, r) in stages)
    kernel = functools.partial(_mlp_kernel, relus=relus)

    # ---- batch-tiled grid: x/out streamed, weights resident across steps ----
    tb = min(block_b, _round_up(B, 8))      # sublane-aligned batch tile
    grid = (pl.cdiv(B, tb),)

    in_specs = [pl.BlockSpec((tb, d_in), lambda i: (i, 0))]
    wb_args = []
    for (w, b, _) in stages:
        # Full-array blocks with a constant index_map -> fetched once, reused.
        in_specs.append(pl.BlockSpec(w.shape, lambda i: (0, 0)))
        in_specs.append(pl.BlockSpec(b.shape, lambda i: (0, 0)))
        wb_args += [w, b]

    out_padded = pl.pallas_call(
        kernel,
        out_shape=jax.ShapeDtypeStruct((B, padded_out), x.dtype),
        grid=grid,
        in_specs=in_specs,
        out_specs=pl.BlockSpec((tb, padded_out), lambda i: (i, 0)),
        compiler_params=pltpu.CompilerParams(
            dimension_semantics=("parallel",),      # v7x: shard batch tiles across TCs
            vmem_limit_bytes=32 * 1024 * 1024),     # safe on v5e/v6e/v7x for tb<=512
    )(x, *wb_args)

    if padded_out != out_dim:
        return out_padded[:, :out_dim]
    return out_padded


def init_params(key, input_dim: int, output_dim: int):
    """Deterministic PyTorch-style (uniform +/- 1/sqrt(fan_in)) init."""
    dims = [(input_dim, 256), (256, 128), (128, 64), (64, output_dim)]
    params = {}
    keys = jax.random.split(key, 2 * len(dims))
    for i, (fan_in, fan_out) in enumerate(dims):
        bound = 1.0 / jnp.sqrt(fan_in)
        w = jax.random.uniform(keys[2 * i], (fan_in, fan_out),
                               jnp.float32, -bound, bound)
        b = jax.random.uniform(keys[2 * i + 1], (1, fan_out),
                               jnp.float32, -bound, bound)
        params[f"w{i + 1}"] = w
        params[f"b{i + 1}"] = b
    return params


def final_head_ref(x, params, *, relu: bool = False):
    """Plain-JAX reference mirroring the PyTorch module (unfolded)."""
    h = x @ params["w1"] + params["b1"]
    if relu:
        h = jnp.maximum(h, 0.0)
    h = h @ params["w2"] + params["b2"]
    h = h @ params["w3"] + params["b3"]
    if relu:
        h = jnp.maximum(h, 0.0)
    return h @ params["w4"] + params["b4"]


if __name__ == "__main__":
    key = jax.random.PRNGKey(0)
    k_x, k_p = jax.random.split(key)

    batch, input_dim, output_dim = 8, 32, 16
    x = jax.random.normal(k_x, (batch, input_dim), jnp.float32)
    params = init_params(k_p, input_dim, output_dim)

    ok = True
    for relu in (False, True):
        out = final_head_pallas(x, params, relu=relu)
        out = jax.block_until_ready(out)
        ref = final_head_ref(x, params, relu=relu)
        # Folding reassociates f32 math slightly -> 1e-3 tolerance.
        ok &= bool(jnp.allclose(out, ref, atol=1e-3, rtol=1e-3))

    if ok:
        print("KERNEL_OK")
    else:
        print("KERNEL_MISMATCH")
</pallas_src>

<mosaic_0001>
module attributes {stable_mosaic.version = 11 : i64} {
  func.func @_mlp_kernel(%arg0: i32, %arg1: memref<8x32xf32, #tpu.memory_space<vmem>>, %arg2: memref<32x128xf32, #tpu.memory_space<vmem>>, %arg3: memref<1x128xf32, #tpu.memory_space<vmem>>, %arg4: memref<8x128xf32, #tpu.memory_space<vmem>>) attributes {dimension_semantics = [#tpu.dimension_semantics<parallel>], iteration_bounds = array<i64: 1>, scalar_prefetch = 0 : i64, scratch_operands = 0 : i64, tpu.core_type = #tpu.core_type<tc>, window_params = [{transform_indices = @transform_0, window_bounds = array<i64: 8, 32>}, {pipeline_mode = #tpu.pipeline_mode<synchronous>, transform_indices = @transform_1, window_bounds = array<i64: 32, 128>}, {pipeline_mode = #tpu.pipeline_mode<synchronous>, transform_indices = @transform_2, window_bounds = array<i64: 1, 128>}, {transform_indices = @transform_3, window_bounds = array<i64: 8, 128>}]} {
    %c0 = arith.constant 0 : index
    %c0_0 = arith.constant 0 : index
    %0 = vector.load %arg1[%c0, %c0_0] : memref<8x32xf32, #tpu.memory_space<vmem>>, vector<8x32xf32>
    %c0_1 = arith.constant 0 : index
    %c0_2 = arith.constant 0 : index
    %1 = vector.load %arg2[%c0_1, %c0_2] : memref<32x128xf32, #tpu.memory_space<vmem>>, vector<32x128xf32>
    %c0_3 = arith.constant 0 : index
    %c0_4 = arith.constant 0 : index
    %2 = vector.load %arg3[%c0_3, %c0_4] : memref<1x128xf32, #tpu.memory_space<vmem>>, vector<1x128xf32>
    %cst = arith.constant dense<0.000000e+00> : vector<8x128xf32>
    %3 = tpu.matmul %0, %1, %cst {dimension_numbers = #tpu.dot_dimension_numbers<[1], [0], [0], [1], [0, 0, 1, 1], [], []>} : vector<8x32xf32>, vector<32x128xf32>, vector<8x128xf32> -> vector<8x128xf32>
    %4 = vector.broadcast %2 : vector<1x128xf32> to vector<8x128xf32>
    %5 = arith.addf %3, %4 : vector<8x128xf32>
    %c0_5 = arith.constant 0 : index
    %c0_6 = arith.constant 0 : index
    %6 = vector.load %arg4[%c0_5, %c0_6] : memref<8x128xf32, #tpu.memory_space<vmem>>, vector<8x128xf32>
    tpu.vector_store %arg4[%c0_5, %c0_6], %5 {strides = array<i32>} : memref<8x128xf32, #tpu.memory_space<vmem>>, vector<8x128xf32>,
    return
  }
  func.func @transform_0(%arg0: i32) -> (i32, i32) {
    %c0_i32 = arith.constant 0 : i32
    %c0_i32_0 = arith.constant 0 : i32
    return %arg0, %c0_i32 : i32, i32
  }
  func.func @transform_1(%arg0: i32) -> (i32, i32) {
    %c0_i32 = arith.constant 0 : i32
    %c0_i32_0 = arith.constant 0 : i32
    %c0_i32_1 = arith.constant 0 : i32
    return %c0_i32, %c0_i32_0 : i32, i32
  }
  func.func @transform_2(%arg0: i32) -> (i32, i32) {
    %c0_i32 = arith.constant 0 : i32
    %c0_i32_0 = arith.constant 0 : i32
    %c0_i32_1 = arith.constant 0 : i32
    return %c0_i32, %c0_i32_0 : i32, i32
  }
  func.func @transform_3(%arg0: i32) -> (i32, i32) {
    %c0_i32 = arith.constant 0 : i32
    %c0_i32_0 = arith.constant 0 : i32
    return %arg0, %c0_i32 : i32, i32
  }
}

</mosaic_0001>

<llo_original>
// kernel: tpu_custom_call.1
$region0: #{tpu_custom_call.1}
  #allocation0 [shape = 'u32[]', space=smem, size = 0x4, offset = 0x4, fixed_abs, tag = 'smem constant byte address 0x4 - core index']
  #allocation1 [shape = 'u32[144,128]{1,0:T(1,128)}', space=vmem, size = 0x12000, scoped, tag = 'internal scratch']
  %s0 = inlined_call_operand.hbm [shape: f32[8,32], index: 0, kind: input, shape index: {}]
  %s1 = inlined_call_operand.hbm [shape: f32[32,128], index: 1, kind: input, shape index: {}]
  %s2 = inlined_call_operand.vmem [shape: f32[1,128], index: 2, kind: input, shape index: {}]
  %s3 = inlined_call_operand.hbm [shape: f32[8,128], index: 3, kind: output, shape index: {}]
  %s4 = sld [smem:[#allocation0]]
  $region30: #{tpu_custom_call.1} parent=0
    _
  %s6 = ssub.s32 1, %s4
  %s7 = scalar_select 0, %s6, %s4
  $region1: #{tpu_custom_call.1} parent=0
    #allocation2 [shape = 'u8[4096]{0}', space=vmem, size = 0x1000, scoped, tag = 'input window, operand 0, single buffered']
    #allocation3 [shape = 's32[1]{0}', space=sflag, size = 0x4, scoped, tag = 'scoped memory for tpu_custom_call.1']
    #allocation4 [shape = 's32[1]{0}', space=sflag, size = 0x4, scoped, tag = 'scoped memory for tpu_custom_call.1']
    #allocation5 [shape = 'u8[16384]{0}', space=vmem, size = 0x4000, scoped, tag = 'input window, operand 1, single buffered']
    #allocation6 [shape = 's32[1]{0}', space=sflag, size = 0x4, scoped, tag = 'scoped memory for tpu_custom_call.1']
    #allocation7 [shape = 'u8[4096]{0}', space=vmem, size = 0x1000, scoped, tag = 'output window, operand 0, single buffered']
    %8 = vsyncpa [#allocation3], 0
    %9 = vsyncpa [#allocation6], 0
    %10 = vsyncpa [#allocation4], 0
    // Predicated region
    $region2: #{tpu_custom_call.1} parent=1 // pred_check
      _
    $region3: #{tpu_custom_call.1} parent=1 // pred_check_branch
      %12 = sbr.rel (0) target = $region5
    $region4: #{tpu_custom_call.1} parent=1 // pred_region
      %s14 = ssub.s32 128, 128
      %15 = vsyncadd [#allocation3], %s14
      %s17 = sshll.u32 [#allocation2], 4
      %s18 = int_to_ptr.vmem [resolvable:$true] %s17
      %20 = dma.hbm_to_vmem [thread:$0]  %s0, 128, %s18, [#allocation3]
    $region5: #{tpu_custom_call.1} parent=1 // pred_fallthru
      _
    // Predicated region
    $region6: #{tpu_custom_call.1} parent=1 // pred_check
      _
    $region7: #{tpu_custom_call.1} parent=1 // pred_check_branch
      %22 = sbr.rel (0) target = $region9
    $region8: #{tpu_custom_call.1} parent=1 // pred_region
      %s24 = ssub.s32 512, 512
      %25 = vsyncadd [#allocation6], %s24
      %s26 = sshll.u32 [#allocation5], 4
      %s27 = int_to_ptr.vmem [resolvable:$true] %s26
      %32 = dma.hbm_to_vmem [thread:$0]  %s1, 512, %s27, [#allocation6], 128, 128, 8
    $region9: #{tpu_custom_call.1} parent=1 // pred_fallthru
      _
    // Predicated region
    $region10: #{tpu_custom_call.1} parent=1 // pred_check
      _
    $region11: #{tpu_custom_call.1} parent=1 // pred_check_branch
      %34 = sbr.rel (0) target = $region13
    $region12: #{tpu_custom_call.1} parent=1 // pred_region
      _
    $region13: #{tpu_custom_call.1} parent=1 // pred_fallthru
      _
    // Predicated region
    $region14: #{tpu_custom_call.1} parent=1 // pred_check
      _
    $region15: #{tpu_custom_call.1} parent=1 // pred_check_branch
      %36 = sbr.rel (0) target = $region17
    $region16: #{tpu_custom_call.1} parent=1 // pred_region
      %37 = dma.done [#allocation3], 128
    $region17: #{tpu_custom_call.1} parent=1 // pred_fallthru
      _
    // Predicated region
    $region18: #{tpu_custom_call.1} parent=1 // pred_check
      _
    $region19: #{tpu_custom_call.1} parent=1 // pred_check_branch
      %39 = sbr.rel (0) target = $region21
    $region20: #{tpu_custom_call.1} parent=1 // pred_region
      %40 = dma.done [#allocation6], 512
    $region21: #{tpu_custom_call.1} parent=1 // pred_fallthru
      _
    %v41 = vld [vmem:[#allocation2] sm:$0xff]
    %v42 = vld [vmem:[#allocation5] sm:$0xff]
    %v43 = vld [vmem:[#allocation5 + $0x8] sm:$0xff]
    %v44 = vld [vmem:[#allocation5 + $0x10] sm:$0xff]
    %v45 = vld [vmem:[#allocation5 + $0x18] sm:$0xff]
    %v46 = vld [vmem:[%s2] sm:$0x1]
    %v48 = vlaneseq
    %v49 = vshrl.u32 %v48, 7
    %v50 = vsub.s32 0, %v49
    %v51 = vrot.slane %v46, %v50
    %vm53 = vcmask 261120
    %v55 = vsel %vm53, %v41, 0
    %57 = vmatprep.subr.mxu0 0.0
    %58 = vmatpush1.msra.mxu0 %v42
    %59 = vmatprep.subr.mxu0 0.0
    %60 = vmatpush1.msra.mxu0 %v43
    %61 = vmatprep.subr.mxu0 0.0
    %62 = vmatpush1.msra.mxu0 %v44
    %63 = vmatprep.subr.mxu0 0.0
    %64 = vmatpush1.msra.mxu0 %v45
    %65 = vmatprep.subr.mxu0 0.0
    %66 = vmatpush1.msra.mxu0 0.0
    %67 = vmatprep.subr.mxu0 0.0
    %68 = vmatpush1.msra.mxu0 0.0
    %69 = vmatprep.subr.mxu0 0.0
    %70 = vmatpush1.msra.mxu0 0.0
    %71 = vmatprep.subr.mxu0 0.0
    %72 = vmatpush1.msra.mxu0 0.0
    %73 = vmatprep.subr.mxu0 0.0
    %74 = vmatpush1.msra.mxu0 0.0
    %75 = vmatprep.subr.mxu0 0.0
    %76 = vmatpush1.msra.mxu0 0.0
    %77 = vmatprep.subr.mxu0 0.0
    %78 = vmatpush1.msra.mxu0 0.0
    %79 = vmatprep.subr.mxu0 0.0
    %80 = vmatpush1.msra.mxu0 0.0
    %81 = vmatprep.subr.mxu0 0.0
    %82 = vmatpush1.msra.mxu0 0.0
    %83 = vmatprep.subr.mxu0 0.0
    %84 = vmatpush1.msra.mxu0 0.0
    %85 = vmatprep.subr.mxu0 0.0
    %86 = vmatpush1.msra.mxu0 0.0
    %87 = vmatprep.subr.mxu0 0.0
    %88 = vmatpush1.msra.mxu0 0.0
    %89 = vmatprep.subr.mxu0 0.0
    %90 = vmatpush1.msra.mxu0 0.0
    %91 = vmatprep.subr.mxu0 0.0
    %92 = vmatpush1.msra.mxu0 0.0
    %93 = vmatprep.subr.mxu0 0.0
    %94 = vmatpush1.msra.mxu0 0.0
    %95 = vmatprep.subr.mxu0 0.0
    %96 = vmatpush1.msra.mxu0 0.0
    %97 = vmatprep.subr.mxu0 0.0
    %98 = vmatpush1.msra.mxu0 0.0
    %99 = vmatprep.subr.mxu0 0.0
    %100 = vmatpush1.msra.mxu0 0.0
    %101 = vmatprep.subr.mxu0 0.0
    %102 = vmatpush1.msra.mxu0 0.0
    %103 = vmatprep.subr.mxu0 0.0
    %104 = vmatpush1.msra.mxu0 0.0
    %105 = vmatprep.subr.mxu0 0.0
    %106 = vmatpush1.msra.mxu0 0.0
    %107 = vmatprep.subr.mxu0 0.0
    %108 = vmatpush1.msra.mxu0 0.0
    %109 = vmatprep.subr.mxu0 0.0
    %110 = vmatpush1.msra.mxu0 0.0
    %111 = vmatprep.subr.mxu0 0.0
    %112 = vmatpush1.msra.mxu0 0.0
    %113 = vmatprep.subr.mxu0 0.0
    %114 = vmatpush1.msra.mxu0 0.0
    %115 = vmatprep.subr.mxu0 0.0
    %116 = vmatpush1.msra.mxu0 0.0
    %117 = vmatprep.subr.mxu0 0.0
    %118 = vmatpush1.msra.mxu0 0.0
    %119 = vmatprep.subr.mxu0 0.0
    %120 = vmatpush1.msra.mxu0 0.0
    %121 = vmatprep.mubr.f32.mxu0 0.0
    %122 = vmatmul.mubr.f32.gmra.mrb[0].mxu0 %v55
    %v123 = vpop.f32.mrb[0].mxu0
    %v124 = vadd.f32 %v51, %v123
    %v125 = vpop.f32.mrb[0].mxu0
    %126 = vdwg.mxu0
    %127 = vst [vmem:[#allocation7] sm:$0xff] %v124
    // Predicated region
    $region22: #{tpu_custom_call.1} parent=1 // pred_check
      _
    $region23: #{tpu_custom_call.1} parent=1 // pred_check_branch
      %129 = sbr.rel (0) target = $region25
    $region24: #{tpu_custom_call.1} parent=1 // pred_region
      %s131 = ssub.s32 128, 128
      %132 = vsyncadd [#allocation4], %s131
      %s134 = sshll.u32 [#allocation7], 4
      %s135 = int_to_ptr.vmem [resolvable:$true] %s134
      %137 = dma.vmem_to_hbm [thread:$0]  %s135, 128, %s3, [#allocation4]
    $region25: #{tpu_custom_call.1} parent=1 // pred_fallthru
      _
    // Predicated region
    $region26: #{tpu_custom_call.1} parent=1 // pred_check
      _
    $region27: #{tpu_custom_call.1} parent=1 // pred_check_branch
      %139 = sbr.rel (0) target = $region29
    $region28: #{tpu_custom_call.1} parent=1 // pred_region
      %140 = dma.done [#allocation4], 128
    $region29: #{tpu_custom_call.1} parent=1 // pred_fallthru
      _
    %141 = vsyncpa [#allocation3], 1
    %142 = vsyncpa [#allocation6], 1
    %143 = vsyncpa [#allocation4], 1

</llo_original>
